<compile_context>
chip_gen: v7x
topology: tpu7x:2x2x1
jax: 0.10.0
libtpu: 0.0.40
codegen_flags: <defaults>
</compile_context>

<pallas_src>
import functools

import jax
import jax.numpy as jnp
from jax.experimental import pallas as pl
from jax.experimental.pallas import tpu as pltpu


_LANE = 128
_K_TILE = 512                 # C_in tile when the weight must be streamed
_N_TILE = 256                 # C_out tile when the output/acc must be bounded
_TS_PREF = 8192               # preferred spatial (lane) tile; shrunk to fit VMEM
_SINGLE_BUF_W_BYTES = 1 << 20  # single-buffer the resident weight above this


def _round_up(x, m):
    return ((x + m - 1) // m) * m


def _vmem_budget_and_limit():
    """Generation-aware scoped-VMEM limit and tile-planning budget."""
    try:
        cap = int(pltpu.get_tpu_info().vmem_capacity_bytes)
    except Exception:
        cap = 64 * 1024 * 1024            # conservative fallback (v7x physical)
    limit = min(cap * 3 // 4, 100 * 1024 * 1024)   # v7x: 48 MiB, v5e/v6e: 96 MiB
    budget = limit * 4 // 5
    return budget, limit


def _plan_tiles(c_in, c_out, S, in_b, w_b, out_b, budget):
    """Pick (tn, tk, ts, single_buffer_weight) so all tiles fit the budget."""
    s_cap = max(_LANE, _round_up(S, _LANE))

    def est(tn, tk, ts, w_bufs):
        e = 2 * tk * ts * in_b             # x tile (native dtype, double-buffered)
        e += tk * ts * 2                   # in-kernel bf16 copy of the x tile
        e += w_bufs * tn * tk * w_b        # weight block(s)
        e += 2 * tn * _LANE * 4            # bias (tn,1) lane-pads to (tn,128) f32
        e += 2 * tn * ts * out_b           # output tile (double-buffered)
        e += tn * ts * 4                   # f32 accumulator / dot result
        return e

    # Candidate (tn, tk) configs, best first: fully resident weight, then
    # C_out tiling, then weight streaming over C_in.
    cands = [(c_out, c_in)]
    if c_out > _N_TILE:
        cands.append((_N_TILE, c_in))
    if c_in > _K_TILE:
        cands.append((c_out, _K_TILE))
        if c_out > _N_TILE:
            cands.append((_N_TILE, _K_TILE))

    for tn, tk in cands:
        resident_w = (tk == c_in)
        single_buf_w = (resident_w and tn == c_out
                        and tn * tk * w_b >= _SINGLE_BUF_W_BYTES)
        w_bufs = 1 if single_buf_w else 2
        if w_bufs * tn * tk * w_b > budget // 3:
            continue                       # weight slab would starve the data tiles
        ts = min(_TS_PREF, s_cap)
        while ts > _LANE and est(tn, tk, ts, w_bufs) > budget:
            ts = max(_LANE, (ts // 2) // _LANE * _LANE)
        if est(tn, tk, ts, w_bufs) <= budget:
            return tn, tk, ts, single_buf_w

    # Last resort: maximal tiling, minimal spatial tile.
    return min(c_out, _N_TILE), min(c_in, _K_TILE), _LANE, False


# ---------------------------------------------------------------------------
# Kernels
# ---------------------------------------------------------------------------
def _conv1x1_kernel(x_ref, w_ref, b_ref, o_ref, *, compute_dtype):
    # x_ref: (C_in, ts) native dtype; w_ref: (tn, C_in) compute dtype;
    # b_ref: (tn, 1) f32; o_ref: (tn, ts).
    x = x_ref[...].astype(compute_dtype)          # per-tile cast (no HBM pre-pass)
    acc = jnp.dot(w_ref[...], x, preferred_element_type=jnp.float32)
    o_ref[...] = (acc + b_ref[...]).astype(o_ref.dtype)


def _conv1x1_kernel_ktiled(x_ref, w_ref, b_ref, o_ref, acc_ref, *, compute_dtype):
    # Reduction grid axis (innermost) over C_in tiles, f32 VMEM accumulator.
    k = pl.program_id(3)

    @pl.when(k == 0)
    def _():
        acc_ref[...] = jnp.zeros_like(acc_ref)

    x = x_ref[...].astype(compute_dtype)
    acc_ref[...] += jnp.dot(w_ref[...], x, preferred_element_type=jnp.float32)

    @pl.when(k == pl.num_programs(3) - 1)
    def _():
        o_ref[...] = (acc_ref[...] + b_ref[...]).astype(o_ref.dtype)


# ---------------------------------------------------------------------------
# Wrapper
# ---------------------------------------------------------------------------
def conv1x1_pallas(x_bcs, weight_oc, bias_col, out_dtype, *,
                   compute_dtype=jnp.bfloat16):
    """out[b] = weight_oc @ x_bcs[b] + bias_col, tiled for the TPU.

    x_bcs:     [B, C_in, S]   (native dtype; cast to compute_dtype per tile)
    weight_oc: [C_out, C_in]  (compute dtype)
    bias_col:  [C_out, 1]     (f32)
    returns    [B, C_out, S]  (out_dtype)
    """
    B, c_in, S = x_bcs.shape
    c_out = weight_oc.shape[0]

    in_b = x_bcs.dtype.itemsize
    w_b = weight_oc.dtype.itemsize
    out_b = jnp.dtype(out_dtype).itemsize

    budget, vmem_limit = _vmem_budget_and_limit()
    tn, tk, ts, single_buf_w = _plan_tiles(c_in, c_out, S, in_b, w_b, out_b,
                                           budget)

    num_k = pl.cdiv(c_in, tk)
    num_n = pl.cdiv(c_out, tn)
    num_s = pl.cdiv(S, ts)      # ragged last spatial block is masked by Pallas

    # Only the reduction axis must not be ragged: zero-pad C_in when streaming.
    if num_k > 1:
        c_in_pad = _round_up(c_in, tk)
        if c_in_pad != c_in:
            x_bcs = jnp.pad(x_bcs, ((0, 0), (0, c_in_pad - c_in), (0, 0)))
            weight_oc = jnp.pad(weight_oc, ((0, 0), (0, c_in_pad - c_in)))
    else:
        c_in_pad = c_in

    weight_reads = 1 if (num_k == 1 and num_n == 1) else B * num_s
    cost = pl.CostEstimate(
        flops=2 * B * S * c_in * c_out,
        transcendentals=0,
        bytes_accessed=(B * c_in * S * in_b
                        + weight_reads * c_out * c_in_pad * w_b
                        + c_out * 4
                        + B * c_out * S * out_b),
    )

    if num_k == 1:
        # Resident-weight path.  Grid order: n innermost of s, so the x block
        # index (b, 0, s) is unchanged across n and never re-fetched.
        grid = (B, num_s, num_n)
        if single_buf_w:
            # Constant block index -> never re-fetched; a single buffer halves
            # its VMEM footprint so ts can stay large.
            w_spec = pl.BlockSpec((tn, c_in_pad), lambda b, s, n: (n, 0),
                                  pipeline_mode=pl.Buffered(1))
        else:
            w_spec = pl.BlockSpec((tn, c_in_pad), lambda b, s, n: (n, 0))
        in_specs = [
            pl.BlockSpec((None, c_in_pad, ts), lambda b, s, n: (b, 0, s)),
            w_spec,
            pl.BlockSpec((tn, 1), lambda b, s, n: (n, 0)),
        ]
        out_specs = pl.BlockSpec((None, tn, ts), lambda b, s, n: (b, n, s))
        scratch = []
        kernel = functools.partial(_conv1x1_kernel, compute_dtype=compute_dtype)
        dims = ("parallel", "parallel", "parallel")
    else:
        # Streamed-weight path: reduction axis (k) last, f32 accumulator.
        grid = (B, num_s, num_n, num_k)
        in_specs = [
            pl.BlockSpec((None, tk, ts), lambda b, s, n, k: (b, k, s)),
            pl.BlockSpec((tn, tk), lambda b, s, n, k: (n, k)),
            pl.BlockSpec((tn, 1), lambda b, s, n, k: (n, 0)),
        ]
        out_specs = pl.BlockSpec((None, tn, ts), lambda b, s, n, k: (b, n, s))
        scratch = [pltpu.VMEM((tn, ts), jnp.float32)]
        kernel = functools.partial(_conv1x1_kernel_ktiled,
                                   compute_dtype=compute_dtype)
        dims = ("parallel", "parallel", "parallel", "arbitrary")

    return pl.pallas_call(
        kernel,
        out_shape=jax.ShapeDtypeStruct((B, c_out, S), out_dtype),
        grid_spec=pltpu.PrefetchScalarGridSpec(
            num_scalar_prefetch=0,
            grid=grid,
            in_specs=in_specs,
            out_specs=out_specs,
            scratch_shapes=scratch,
        ),
        compiler_params=pltpu.CompilerParams(
            dimension_semantics=dims,
            vmem_limit_bytes=vmem_limit,
        ),
        cost_estimate=cost,
    )(x_bcs, weight_oc, bias_col)


def linear_forward(x_nchw, weight, bias, *, use_bf16=True):
    """Equivalent of nn.Conv2d(c_in, c_out, kernel_size=1, bias=True)(x).

    x_nchw: [B, C_in, H, W], weight: [C_out, C_in, 1, 1], bias: [C_out]
    returns [B, C_out, H, W]  (same dtype as x).

    use_bf16=True runs the matmul in bf16 on the MXU with f32 accumulation
    (x is cast per tile inside the kernel); set False for full f32 compute.
    """
    B, c_in, H, W = x_nchw.shape
    c_out = weight.shape[0]
    S = H * W

    out_dtype = x_nchw.dtype
    compute_dtype = jnp.bfloat16 if use_bf16 else x_nchw.dtype

    # NCHW -> [B, C_in, S] is a contiguous reshape (no transpose, no cast).
    x_bcs = x_nchw.reshape(B, c_in, S)
    w_oc = weight.reshape(c_out, c_in).astype(compute_dtype)   # tiny, one-off
    b_col = bias.reshape(c_out, 1).astype(jnp.float32)

    out_bcs = conv1x1_pallas(x_bcs, w_oc, b_col, out_dtype,
                             compute_dtype=compute_dtype)       # [B, C_out, S]
    return out_bcs.reshape(B, c_out, H, W)                      # contiguous reshape


def init_params(key, c_in, c_out, dtype=jnp.float32):
    """Deterministic init mimicking PyTorch Conv2d defaults (uniform +-1/sqrt(fan_in))."""
    kw, kb = jax.random.split(key)
    fan_in = c_in * 1 * 1
    bound = 1.0 / jnp.sqrt(jnp.asarray(fan_in, dtype=jnp.float32))
    weight = jax.random.uniform(kw, (c_out, c_in, 1, 1), dtype, -bound, bound)
    bias = jax.random.uniform(kb, (c_out,), dtype, -bound, bound)
    return weight, bias


if __name__ == "__main__":
    key = jax.random.PRNGKey(0)
    kx, kp = jax.random.split(key)

    B, C_IN, C_OUT, H, W = 2, 4, 8, 16, 16
    x = jax.random.normal(kx, (B, C_IN, H, W), jnp.float32)
    weight, bias = init_params(kp, C_IN, C_OUT)

    fwd = jax.jit(functools.partial(linear_forward, use_bf16=True))
    y = fwd(x, weight, bias)
    jax.block_until_ready(y)

    # Reference check against plain-JAX 1x1 conv in f32.  The kernel runs the
    # matmul in bf16 on the MXU (f32 accumulation), so tolerance is loosened.
    ref = jnp.einsum("bchw,oc->bohw", x, weight.reshape(C_OUT, C_IN)) \
        + bias[None, :, None, None]
    assert y.shape == (B, C_OUT, H, W)
    assert y.dtype == x.dtype
    assert jnp.allclose(y, ref, atol=3e-2, rtol=3e-2), \
        float(jnp.max(jnp.abs(y - ref)))

    print("KERNEL_OK")
</pallas_src>

<mosaic_0001>
module attributes {stable_mosaic.version = 11 : i64} {
  func.func @_conv1x1_kernel(%arg0: i32, %arg1: i32, %arg2: i32, %arg3: memref<1x4x256xf32, #tpu.memory_space<vmem>>, %arg4: memref<8x4xbf16, #tpu.memory_space<vmem>>, %arg5: memref<8x1xf32, #tpu.memory_space<vmem>>, %arg6: memref<1x8x256xf32, #tpu.memory_space<vmem>>) attributes {dimension_semantics = [#tpu.dimension_semantics<parallel>, #tpu.dimension_semantics<parallel>, #tpu.dimension_semantics<parallel>], iteration_bounds = array<i64: 2, 1, 1>, scalar_prefetch = 0 : i64, scratch_operands = 0 : i64, tpu.core_type = #tpu.core_type<tc>, window_params = [{transform_indices = @transform_0, window_bounds = array<i64: 1, 4, 256>}, {transform_indices = @transform_1, window_bounds = array<i64: 8, 4>}, {transform_indices = @transform_2, window_bounds = array<i64: 8, 1>}, {transform_indices = @transform_3, window_bounds = array<i64: 1, 8, 256>}]} {
    %c0 = arith.constant 0 : index
    %c0_0 = arith.constant 0 : index
    %c0_1 = arith.constant 0 : index
    %0 = vector.load %arg3[%c0, %c0_0, %c0_1] : memref<1x4x256xf32, #tpu.memory_space<vmem>>, vector<1x4x256xf32>
    %1 = vector.shape_cast %0 : vector<1x4x256xf32> to vector<4x256xf32>
    %2 = arith.truncf %1 : vector<4x256xf32> to vector<4x256xbf16>
    %c0_2 = arith.constant 0 : index
    %c0_3 = arith.constant 0 : index
    %3 = vector.load %arg4[%c0_2, %c0_3] : memref<8x4xbf16, #tpu.memory_space<vmem>>, vector<8x4xbf16>
    %cst = arith.constant dense<0.000000e+00> : vector<8x256xf32>
    %4 = tpu.matmul %3, %2, %cst {dimension_numbers = #tpu.dot_dimension_numbers<[1], [0], [0], [1], [0, 0, 1, 1], [], []>} : vector<8x4xbf16>, vector<4x256xbf16>, vector<8x256xf32> -> vector<8x256xf32>
    %c0_4 = arith.constant 0 : index
    %c0_5 = arith.constant 0 : index
    %5 = vector.load %arg5[%c0_4, %c0_5] : memref<8x1xf32, #tpu.memory_space<vmem>>, vector<8x1xf32>
    %6 = vector.broadcast %5 : vector<8x1xf32> to vector<8x256xf32>
    %7 = arith.addf %4, %6 : vector<8x256xf32>
    %c0_6 = arith.constant 0 : index
    %c0_7 = arith.constant 0 : index
    %c0_8 = arith.constant 0 : index
    %8 = vector.load %arg6[%c0_6, %c0_7, %c0_8] : memref<1x8x256xf32, #tpu.memory_space<vmem>>, vector<1x8x256xf32>
    %9 = vector.shape_cast %8 : vector<1x8x256xf32> to vector<8x256xf32>
    %10 = vector.shape_cast %7 : vector<8x256xf32> to vector<1x8x256xf32>
    tpu.vector_store %arg6[%c0_6, %c0_7, %c0_8], %10 {strides = array<i32>} : memref<1x8x256xf32, #tpu.memory_space<vmem>>, vector<1x8x256xf32>,
    return
  }
  func.func @transform_0(%arg0: i32, %arg1: i32, %arg2: i32) -> (i32, i32, i32) {
    %c0_i32 = arith.constant 0 : i32
    %c0_i32_0 = arith.constant 0 : i32
    return %arg0, %c0_i32, %arg1 : i32, i32, i32
  }
  func.func @transform_1(%arg0: i32, %arg1: i32, %arg2: i32) -> (i32, i32) {
    %c0_i32 = arith.constant 0 : i32
    %c0_i32_0 = arith.constant 0 : i32
    return %arg2, %c0_i32 : i32, i32
  }
  func.func @transform_2(%arg0: i32, %arg1: i32, %arg2: i32) -> (i32, i32) {
    %c0_i32 = arith.constant 0 : i32
    %c0_i32_0 = arith.constant 0 : i32
    return %arg2, %c0_i32 : i32, i32
  }
  func.func @transform_3(%arg0: i32, %arg1: i32, %arg2: i32) -> (i32, i32, i32) {
    %c0_i32 = arith.constant 0 : i32
    return %arg0, %arg2, %arg1 : i32, i32, i32
  }
}

</mosaic_0001>

<llo_original>
// kernel: linear_forward.1
$region0: #{linear_forward.1}
  #allocation0 [shape = 'u32[]', space=smem, size = 0x4, offset = 0x4, fixed_abs, tag = 'smem constant byte address 0x4 - core index']
  #allocation1 [shape = 'u32[144,128]{1,0:T(1,128)}', space=vmem, size = 0x12000, scoped, tag = 'internal scratch']
  %s0 = inlined_call_operand.vmem [shape: f32[2,4,256], index: 0, kind: input, shape index: {}]
  %s1 = inlined_call_operand.vmem [shape: bf16[8,4], index: 1, kind: input, shape index: {}]
  %s2 = inlined_call_operand.vmem [shape: f32[8,1], index: 2, kind: input, shape index: {}]
  %s3 = inlined_call_operand.vmem [shape: f32[2,8,256], index: 3, kind: output, shape index: {}]
  %s4 = sld [smem:[#allocation0]]
  $region45: #{linear_forward.1} parent=0
    _
  %s6 = ssub.s32 1, %s4
  %s7 = scalar_select 0, %s6, %s4
  loop: start=0, step=1, limit=4
  $region2: #{linear_forward.1} parent=0 // loop_pre_header
    _
  $region3: #{linear_forward.1} parent=0 // loop_header
    %s9 = sphi 0, %s13
    %p10 = scmp.ge.s32.totalorder %s9, 4
    %s16 = sphi 0, %s35
    %s17 = sphi 0, %s31
    %s18 = sphi 0, %s27
    %s19 = sphi 0, %s16
    %s20 = sphi 0, %s17
    %s21 = sphi 0, %s18
    %s22 = sphi 0, %s19
    %s23 = sphi 0, %s20
    %s24 = sphi 0, %s21
    %s40 = sphi 0, %s42
    %s43 = sphi 0, %s40
    %s44 = sphi 0, %s43
    %s60 = sphi 0, %s44
    %s66 = sphi 0, %s68
    %s69 = sphi 0, %s66
    %s70 = sphi 0, %s69
    %s86 = sphi 0, %s70
    %s92 = sphi 0, %s94
    %s95 = sphi 0, %s92
    %s96 = sphi 0, %s95
    %s112 = sphi 0, %s96
    %s122 = sphi 0, %s124
    %s125 = sphi 0, %s122
    %s126 = sphi 0, %s125
    %s142 = sphi 0, %s126
  $region4: #{linear_forward.1} parent=0 // loop_header_branch
    %12 = sbr.rel (%p10) target = $region8
  $region5: #{linear_forward.1} parent=0 // loop_body
    %s14 = ssub.s32 %s9, 1
    %s15 = ssub.s32 %s9, 2
    %s25 = sadd.s32 1, %s18
    %p26 = scmp.ge.s32.totalorder %s25, 1
    %s27 = scalar_select %p26, 0, %s25
    %s28 = sadd.s32 1, %s17
    %s29 = scalar_select %p26, %s28, %s17
    %p30 = scmp.ge.s32.totalorder %s29, 1
    %s31 = scalar_select %p30, 0, %s29
    %s32 = sadd.s32 1, %s16
    %s33 = scalar_select %p30, %s32, %s16
    %p34 = scmp.ge.s32.totalorder %s33, 2
    %s35 = scalar_select %p34, 0, %s33
    %s36 = ssub.s32 %s16, %s35
    %s37 = ssub.s32 %s17, %s31
    %s38 = sor.u32 %s36, %s37
    %p39 = scmp.eq.s32.totalorder %s38, 0
    %s41 = sadd.s32 %s40, 1
    %s42 = scalar_select %p39, %s40, %s41
    %p45 = pneg %p39
    %p46 = scmp.eq.s32.totalorder %s9, 1
    %p47 = por %p45, %p46
    %p48 = scmp.ne.s32.totalorder %s40, %s43
    %p49 = scmp.eq.s32.totalorder %s9, 0
    %p50 = por %p48, %p49
    %p51 = scmp.ne.s32.totalorder %s40, %s43
    %p52 = scmp.eq.s32.totalorder %s14, 1
    %p53 = por %p51, %p52
    %p54 = scmp.ne.s32.totalorder %s43, %s44
    %p55 = scmp.eq.s32.totalorder %s14, 0
    %p56 = por %p54, %p55
    %p57 = scmp.ne.s32.totalorder %s43, %s44
    %p58 = scmp.eq.s32.totalorder %s15, 1
    %p59 = por %p57, %p58
    %p61 = scmp.ne.s32.totalorder %s44, %s60
    %p62 = scmp.eq.s32.totalorder %s15, 0
    %p63 = por %p61, %p62
    %s64 = ssub.s32 %s18, %s27
    %p65 = scmp.eq.s32.totalorder %s64, 0
    %s67 = sadd.s32 %s66, 1
    %s68 = scalar_select %p65, %s66, %s67
    %p71 = pneg %p65
    %p72 = scmp.eq.s32.totalorder %s9, 1
    %p73 = por %p71, %p72
    %p74 = scmp.ne.s32.totalorder %s66, %s69
    %p75 = scmp.eq.s32.totalorder %s9, 0
    %p76 = por %p74, %p75
    %p77 = scmp.ne.s32.totalorder %s66, %s69
    %p78 = scmp.eq.s32.totalorder %s14, 1
    %p79 = por %p77, %p78
    %p80 = scmp.ne.s32.totalorder %s69, %s70
    %p81 = scmp.eq.s32.totalorder %s14, 0
    %p82 = por %p80, %p81
    %p83 = scmp.ne.s32.totalorder %s69, %s70
    %p84 = scmp.eq.s32.totalorder %s15, 1
    %p85 = por %p83, %p84
    %p87 = scmp.ne.s32.totalorder %s70, %s86
    %p88 = scmp.eq.s32.totalorder %s15, 0
    %p89 = por %p87, %p88
    %s90 = ssub.s32 %s18, %s27
    %p91 = scmp.eq.s32.totalorder %s90, 0
    %s93 = sadd.s32 %s92, 1
    %s94 = scalar_select %p91, %s92, %s93
    %p97 = pneg %p91
    %p98 = scmp.eq.s32.totalorder %s9, 1
    %p99 = por %p97, %p98
    %p100 = scmp.ne.s32.totalorder %s92, %s95
    %p101 = scmp.eq.s32.totalorder %s9, 0
    %p102 = por %p100, %p101
    %p103 = scmp.ne.s32.totalorder %s92, %s95
    %p104 = scmp.eq.s32.totalorder %s14, 1
    %p105 = por %p103, %p104
    %p106 = scmp.ne.s32.totalorder %s95, %s96
    %p107 = scmp.eq.s32.totalorder %s14, 0
    %p108 = por %p106, %p107
    %p109 = scmp.ne.s32.totalorder %s95, %s96
    %p110 = scmp.eq.s32.totalorder %s15, 1
    %p111 = por %p109, %p110
    %p113 = scmp.ne.s32.totalorder %s96, %s112
    %p114 = scmp.eq.s32.totalorder %s15, 0
    %p115 = por %p113, %p114
    %s116 = ssub.s32 %s16, %s35
    %s117 = ssub.s32 %s18, %s27
    %s118 = sor.u32 %s116, %s117
    %s119 = ssub.s32 %s17, %s31
    %s120 = sor.u32 %s118, %s119
    %p121 = scmp.eq.s32.totalorder %s120, 0
    %s123 = sadd.s32 %s122, 1
    %s124 = scalar_select %p121, %s122, %s123
    %p127 = pneg %p121
    %p128 = scmp.eq.s32.totalorder %s9, 1
    %p129 = por %p127, %p128
    %p130 = scmp.ne.s32.totalorder %s122, %s125
    %p131 = scmp.eq.s32.totalorder %s9, 0
    %p132 = por %p130, %p131
    %p133 = scmp.ne.s32.totalorder %s122, %s125
    %p134 = scmp.eq.s32.totalorder %s14, 1
    %p135 = por %p133, %p134
    %p136 = scmp.ne.s32.totalorder %s125, %s126
    %p137 = scmp.eq.s32.totalorder %s14, 0
    %p138 = por %p136, %p137
    %p139 = scmp.ne.s32.totalorder %s125, %s126
    %p140 = scmp.eq.s32.totalorder %s15, 1
    %p141 = por %p139, %p140
    %p143 = scmp.ne.s32.totalorder %s126, %s142
    %p144 = scmp.eq.s32.totalorder %s15, 0
    %p145 = por %p143, %p144
    %p146 = scmp.le.s32.totalorder 1, %s9
    %p147 = scmp.lt.s32.totalorder %s9, 3
    %p148 = pnand %p146, %p147
    %p149 = pneg %p148
    // Predicated region
    $region9: #{linear_forward.1} parent=5 // pred_check
      _
    $region10: #{linear_forward.1} parent=5 // pred_check_branch
      %151 = sbr.rel (%p148) target = $region12
    $region11: #{linear_forward.1} parent=5 // pred_region
      %s152 = ssub.s32 %s9, 1
      // Predicated region
      $region13: #{linear_forward.1} parent=11 // pred_check
        %p153 = pneg %p82
      $region14: #{linear_forward.1} parent=11 // pred_check_branch
        %155 = sbr.rel (%p153) target = $region16
      $region15: #{linear_forward.1} parent=11 // pred_region
        %p156 = scmp.lt.s32.totalorder %s21, 0
        %s157 = scalar_select %p156, %s21, 0
        %s158 = smul.addr %s157, 4
        %s159 = scalar_lea.vmem %s1, %s158
      $region16: #{linear_forward.1} parent=11 // pred_fallthru
        _
      // Predicated region
      $region17: #{linear_forward.1} parent=11 // pred_check
        %p160 = pneg %p108
      $region18: #{linear_forward.1} parent=11 // pred_check_branch
        %162 = sbr.rel (%p160) target = $region20
      $region19: #{linear_forward.1} parent=11 // pred_region
        %p163 = scmp.lt.s32.totalorder %s21, 0
        %s164 = scalar_select %p163, %s21, 0
        %s165 = smul.addr %s164, 8
        %s166 = scalar_lea.vmem %s2, %s165
      $region20: #{linear_forward.1} parent=11 // pred_fallthru
        _
    $region12: #{linear_forward.1} parent=5 // pred_fallthru
      _
    %p167 = scmp.lt.s32.totalorder %s9, 2
    // Predicated region
    $region21: #{linear_forward.1} parent=5 // pred_check
      %p168 = pneg %p167
    $region22: #{linear_forward.1} parent=5 // pred_check_branch
      %170 = sbr.rel (%p168) target = $region24
    $region23: #{linear_forward.1} parent=5 // pred_region
      // Predicated region
      $region25: #{linear_forward.1} parent=23 // pred_check
        %p171 = pneg %p50
      $region26: #{linear_forward.1} parent=23 // pred_check_branch
        %173 = sbr.rel (%p171) target = $region28
      $region27: #{linear_forward.1} parent=23 // pred_region
        %s174 = smul.u32 2, %s17
        %p175 = scmp.lt.s32.totalorder %s16, 1
        %s176 = scalar_select %p175, %s16, 1
        %p177 = scmp.lt.s32.totalorder %s174, 1
        %s178 = scalar_select %p177, %s174, 1
        %s179 = smul.addr %s176, 2
        %s180 = sadd.s32 %s178, %s179
        %s181 = smul.addr %s180, 4
        %s182 = scalar_lea.vmem %s0, %s181
        %s183 = smul.u32 2, %s17
      $region28: #{linear_forward.1} parent=23 // pred_fallthru
        _
    $region24: #{linear_forward.1} parent=5 // pred_fallthru
      _
    %p184 = scmp.le.s32.totalorder 1, %s9
    %p185 = scmp.lt.s32.totalorder %s9, 3
    %p186 = pnand %p184, %p185
    %p187 = pneg %p186
    // Predicated region
    $region29: #{linear_forward.1} parent=5 // pred_check
      _
    $region30: #{linear_forward.1} parent=5 // pred_check_branch
      %189 = sbr.rel (%p186) target = $region32
    $region31: #{linear_forward.1} parent=5 // pred_region
      %s190 = ssub.s32 %s9, 1
      %s191 = smul.u32 2, %s20
      %p192 = scmp.lt.s32.totalorder %s19, 1
      %s193 = scalar_select %p192, %s19, 1
      %p194 = scmp.lt.s32.totalorder %s191, 1
      %s195 = scalar_select %p194, %s191, 1
      %s196 = smul.addr %s193, 2
      %s197 = sadd.s32 %s195, %s196
      %s198 = smul.addr %s197, 4
      %s199 = scalar_lea.vmem %s0, %s198
      %p200 = pneg %p56
      %p201 = pneg %p53
      %p202 = scmp.lt.s32.totalorder %s21, 0
      %s203 = scalar_select %p202, %s21, 0
      %s204 = smul.addr %s203, 4
      %s205 = scalar_lea.vmem %s1, %s204
      %p206 = pneg %p82
      %p207 = pneg %p79
      %p208 = scmp.lt.s32.totalorder %s21, 0
      %s209 = scalar_select %p208, %s21, 0
      %s210 = smul.addr %s209, 8
      %s211 = scalar_lea.vmem %s2, %s210
      %p212 = pneg %p108
      %p213 = pneg %p105
      %p214 = pneg %p138
      %p215 = pneg %p135
      %s216 = smul.u32 2, %s20
      %p217 = scmp.lt.s32.totalorder %s19, 1
      %s218 = scalar_select %p217, %s19, 1
      %p219 = scmp.lt.s32.totalorder %s21, 0
      %s220 = scalar_select %p219, %s21, 0
      %p221 = scmp.lt.s32.totalorder %s216, 1
      %s222 = scalar_select %p221, %s216, 1
      %s223 = smul.addr %s220, 2
      %s224 = sadd.s32 %s222, %s223
      %s225 = smul.addr %s218, 2
      %s226 = sadd.s32 %s224, %s225
      %s227 = smul.addr %s226, 8
      %s228 = scalar_lea.vmem %s3, %s227
      %s229 = smul.u32 2, %s20
      %p230 = scmp.lt.s32.totalorder %s19, 1
      %s231 = scalar_select %p230, %s19, 1
      %p232 = scmp.lt.s32.totalorder %s229, 1
      %s233 = scalar_select %p232, %s229, 1
      %s234 = smul.addr %s231, 2
      %s235 = sadd.s32 %s233, %s234
      %s236 = smul.addr %s235, 4
      %s237 = scalar_lea.vmem %s0, %s236
      %s238 = smul.u32 2, %s20
      %p239 = scmp.lt.s32.totalorder %s21, 0
      %s240 = scalar_select %p239, %s21, 0
      %s241 = smul.addr %s240, 4
      %s242 = scalar_lea.vmem %s1, %s241
      %p243 = scmp.lt.s32.totalorder %s21, 0
      %s244 = scalar_select %p243, %s21, 0
      %s245 = smul.addr %s244, 8
      %s246 = scalar_lea.vmem %s2, %s245
      %s247 = smul.u32 2, %s20
      %p248 = scmp.lt.s32.totalorder %s19, 1
      %s249 = scalar_select %p248, %s19, 1
      %p250 = scmp.lt.s32.totalorder %s21, 0
      %s251 = scalar_select %p250, %s21, 0
      %p252 = scmp.lt.s32.totalorder %s247, 1
      %s253 = scalar_select %p252, %s247, 1
      %s254 = smul.addr %s251, 2
      %s255 = sadd.s32 %s253, %s254
      %s256 = smul.addr %s249, 2
      %s257 = sadd.s32 %s255, %s256
      %s258 = smul.addr %s257, 8
      %s259 = scalar_lea.vmem %s3, %s258
      %s260 = smul.u32 2, %s20
      %v262 = vld [vmem:[%s237] sm:$0xff]
      %v264 = vcombine.high %v262, %v262
      %v266 = vpack.c.bf16 %v262, %v262
      %v267 = vpack.c.bf16 %v264, %v264
      %v268 = vld [vmem:[%s242] sm:$0xf]
      %v269 = vld [vmem:[%s246] sm:$0xff]
      %271 = vset.pattern.permute.xlu0 0
      %272 = vperm.xlu0 %271, %v269
      %v273 = vpop.permute.xlu0 %272
      %vm275 = vcmask 31744
      %v277 = vsel %vm275, %v268, 0
      %vm279 = vcmask 1041408
      %v281 = vsel %vm279, %v266, 0
      %v284 = vsel %vm279, %v267, 0
      %286 = vmatprep.subr.bf16.mxu0 %v284
      %287 = vmatpush1.bf16.msra.mxu0 %v281
      %288 = vmatprep.subr.bf16.mxu0 0
      %289 = vmatpush1.bf16.msra.mxu0 0
      %290 = vmatprep.subr.bf16.mxu0 0
      %291 = vmatpush1.bf16.msra.mxu0 0
      %292 = vmatprep.subr.bf16.mxu0 0
      %293 = vmatpush1.bf16.msra.mxu0 0
      %294 = vmatprep.subr.bf16.mxu0 0
      %295 = vmatpush1.bf16.msra.mxu0 0
      %296 = vmatprep.subr.bf16.mxu0 0
      %297 = vmatpush1.bf16.msra.mxu0 0
      %298 = vmatprep.subr.bf16.mxu0 0
      %299 = vmatpush1.bf16.msra.mxu0 0
      %300 = vmatprep.subr.bf16.mxu0 0
      %301 = vmatpush1.bf16.msra.mxu0 0
      %302 = vmatprep.subr.bf16.mxu0 0
      %303 = vmatpush1.bf16.msra.mxu0 0
      %304 = vmatprep.subr.bf16.mxu0 0
      %305 = vmatpush1.bf16.msra.mxu0 0
      %306 = vmatprep.subr.bf16.mxu0 0
      %307 = vmatpush1.bf16.msra.mxu0 0
      %308 = vmatprep.subr.bf16.mxu0 0
      %309 = vmatpush1.bf16.msra.mxu0 0
      %310 = vmatprep.subr.bf16.mxu0 0
      %311 = vmatpush1.bf16.msra.mxu0 0
      %312 = vmatprep.subr.bf16.mxu0 0
      %313 = vmatpush1.bf16.msra.mxu0 0
      %314 = vmatprep.subr.bf16.mxu0 0
      %315 = vmatpush1.bf16.msra.mxu0 0
      %316 = vmatprep.subr.bf16.mxu0 0
      %317 = vmatpush1.bf16.msra.mxu0 0
      %318 = vmatprep.mubr.bf16.mxu0 0
      %319 = vmatmul.mubr.bf16.gmra.mrb[0].mxu0 %v277
      %v320 = vpop.f32.mrb[0].mxu0
      %v321 = vadd.f32 %v273, %v320
      %v322 = vpop.f32.mrb[0].mxu0
      %v323 = vadd.f32 %v273, %v322
      %v324 = vpop.f32.mrb[0].mxu0
      %v325 = vpop.f32.mrb[0].mxu0
      %326 = vdwg.mxu0
      %327 = vst [vmem:[%s259] sm:$0xff] %v321
      %328 = vst [vmem:[%s259 + $0x8] sm:$0xff] %v323
      %s329 = smul.u32 2, %s20
      %p330 = scmp.lt.s32.totalorder %s19, 1
      %s331 = scalar_select %p330, %s19, 1
      %p332 = scmp.lt.s32.totalorder %s21, 0
      %s333 = scalar_select %p332, %s21, 0
      %p334 = scmp.lt.s32.totalorder %s329, 1
      %s335 = scalar_select %p334, %s329, 1
      %s336 = smul.addr %s333, 2
      %s337 = sadd.s32 %s335, %s336
      %s338 = smul.addr %s331, 2
      %s339 = sadd.s32 %s337, %s338
      %s340 = smul.addr %s339, 8
      %s341 = scalar_lea.vmem %s3, %s340
      // Predicated region
      $region33: #{linear_forward.1} parent=31 // pred_check
        %p342 = pneg %p135
      $region34: #{linear_forward.1} parent=31 // pred_check_branch
        %344 = sbr.rel (%p342) target = $region36
      $region35: #{linear_forward.1} parent=31 // pred_region
        %s345 = smul.u32 2, %s20
      $region36: #{linear_forward.1} parent=31 // pred_fallthru
        _
    $region32: #{linear_forward.1} parent=5 // pred_fallthru
      _
    %p346 = scmp.le.s32.totalorder 2, %s9
    // Predicated region
    $region37: #{linear_forward.1} parent=5 // pred_check
      %p347 = pneg %p346
    $region38: #{linear_forward.1} parent=5 // pred_check_branch
      %349 = sbr.rel (%p347) target = $region40
    $region39: #{linear_forward.1} parent=5 // pred_region
      %s350 = ssub.s32 %s9, 2
      // Predicated region
      $region41: #{linear_forward.1} parent=39 // pred_check
        %p351 = pneg %p141
      $region42: #{linear_forward.1} parent=39 // pred_check_branch
        %353 = sbr.rel (%p351) target = $region44
      $region43: #{linear_forward.1} parent=39 // pred_region
        %s354 = smul.u32 2, %s23
        %p355 = scmp.lt.s32.totalorder %s22, 1
        %s356 = scalar_select %p355, %s22, 1
        %p357 = scmp.lt.s32.totalorder %s24, 0
        %s358 = scalar_select %p357, %s24, 0
        %p359 = scmp.lt.s32.totalorder %s354, 1
        %s360 = scalar_select %p359, %s354, 1
        %s361 = smul.addr %s358, 2
        %s362 = sadd.s32 %s360, %s361
        %s363 = smul.addr %s356, 2
        %s364 = sadd.s32 %s362, %s363
        %s365 = smul.addr %s364, 8
        %s366 = scalar_lea.vmem %s3, %s365
      $region44: #{linear_forward.1} parent=39 // pred_fallthru
        _
    $region40: #{linear_forward.1} parent=5 // pred_fallthru
      _
  $region6: #{linear_forward.1} parent=0 // loop_footer
    %s13 = sadd.s32 1, %s9
  $region7: #{linear_forward.1} parent=0 // loop_footer_branch
    %8 = sbr.rel target = $region3
  $region8: #{linear_forward.1} parent=0 // loop_exit
    _

</llo_original>
